<compile_context>
chip_gen: v7x
topology: tpu7x:2x2x1
jax: 0.10.0
libtpu: 0.0.40
codegen_flags: <defaults>
</compile_context>

<pallas_src>
import jax
import jax.numpy as jnp
from jax.experimental import pallas as pl
from jax.experimental.pallas import tpu as pltpu

HID1 = 128
HID2 = 64
LANE = 128
SUBLANE = 16  # bf16 sublane packing


def _round_up(x, m):
    return ((x + m - 1) // m) * m


def qnet_kernel(x_ref, w1_ref, b1_ref, w2_ref, b2_ref, w3_ref, b3_ref, o_ref):
    # fc1: bf16 MXU matmul, f32 accumulate; bias + ReLU in f32 on the VPU.
    h1 = jnp.dot(x_ref[...], w1_ref[...], preferred_element_type=jnp.float32)
    h1 = jnp.maximum(h1 + b1_ref[...], 0.0).astype(jnp.bfloat16)
    # fc2
    h2 = jnp.dot(h1, w2_ref[...], preferred_element_type=jnp.float32)
    h2 = jnp.maximum(h2 + b2_ref[...], 0.0).astype(jnp.bfloat16)
    # fc3 (no activation) -- output tile is a lane-dense (tile_b, 128) slab.
    out = jnp.dot(h2, w3_ref[...], preferred_element_type=jnp.float32) + b3_ref[...]
    o_ref[...] = out.astype(o_ref.dtype)


def qnetwork_forward(x, params, *, tile_b=1024):
    """x: (B, num_actions) float32.  params: w1,b1,w2,b2,w3,b3 (already transposed
    to (in, out) layout, i.e. torch's weight.T)."""
    B, A = x.shape
    A_pad = _round_up(A, LANE)  # lane-dense width for fc1's K and fc3's N

    # ---- parameter prep: zero-pad the A-sized dims, cast weights to bf16 ----
    w1 = jnp.zeros((A_pad, HID1), jnp.bfloat16).at[:A, :].set(
        params["w1"].astype(jnp.bfloat16))
    b1 = params["b1"].astype(jnp.float32).reshape(1, HID1)
    w2 = params["w2"].astype(jnp.bfloat16)
    b2 = params["b2"].astype(jnp.float32).reshape(1, HID2)
    w3 = jnp.zeros((HID2, A_pad), jnp.bfloat16).at[:, :A].set(
        params["w3"].astype(jnp.bfloat16))
    b3 = jnp.zeros((1, A_pad), jnp.float32).at[:, :A].set(
        params["b3"].astype(jnp.float32).reshape(1, A))

    # ---- batch tiling: big tiles for pipelining, clamped for small batches ----
    tile = _round_up(min(tile_b, _round_up(B, SUBLANE)), SUBLANE)
    B_pad = _round_up(B, tile)
    x_p = jnp.zeros((B_pad, A_pad), jnp.bfloat16).at[:B, :A].set(
        x.astype(jnp.bfloat16))

    grid = (B_pad // tile,)
    const = lambda shape: pl.BlockSpec(shape, lambda i: (0, 0))

    flops = 2 * B_pad * (A_pad * HID1 + HID1 * HID2 + HID2 * A_pad)
    bytes_accessed = (x_p.size * 2 + B_pad * A_pad * 4
                      + (w1.size + w2.size + w3.size) * 2
                      + (b1.size + b2.size + b3.size) * 4)

    out = pl.pallas_call(
        qnet_kernel,
        out_shape=jax.ShapeDtypeStruct((B_pad, A_pad), jnp.float32),
        grid=grid,
        in_specs=[
            pl.BlockSpec((tile, A_pad), lambda i: (i, 0)),   # x: tiled over rows
            const((A_pad, HID1)), const((1, HID1)),          # fc1 (VMEM-resident)
            const((HID1, HID2)), const((1, HID2)),           # fc2 (VMEM-resident)
            const((HID2, A_pad)), const((1, A_pad)),         # fc3 (VMEM-resident)
        ],
        out_specs=pl.BlockSpec((tile, A_pad), lambda i: (i, 0)),
        compiler_params=pltpu.CompilerParams(
            dimension_semantics=("parallel",),
        ),
        cost_estimate=pl.CostEstimate(
            flops=flops, transcendentals=0, bytes_accessed=bytes_accessed),
    )(x_p, w1, b1, w2, b2, w3, b3)

    return out[:B, :A]


def init_params(key, num_actions):
    """Mimics torch.nn.Linear default init: U(-1/sqrt(fan_in), +1/sqrt(fan_in)),
    stored as (in, out) so the kernel can use x @ W directly."""
    dims = [(num_actions, HID1), (HID1, HID2), (HID2, num_actions)]
    params = {}
    keys = jax.random.split(key, 2 * len(dims))
    for i, (fan_in, fan_out) in enumerate(dims):
        bound = 1.0 / jnp.sqrt(float(fan_in))
        params[f"w{i + 1}"] = jax.random.uniform(
            keys[2 * i], (fan_in, fan_out), minval=-bound, maxval=bound,
            dtype=jnp.float32)
        params[f"b{i + 1}"] = jax.random.uniform(
            keys[2 * i + 1], (1, fan_out), minval=-bound, maxval=bound,
            dtype=jnp.float32)
    return params


def qnetwork_ref_f32(x, params):
    h = jnp.maximum(x @ params["w1"] + params["b1"], 0.0)
    h = jnp.maximum(h @ params["w2"] + params["b2"], 0.0)
    return h @ params["w3"] + params["b3"]


def qnetwork_ref_bf16(x, params):
    """Same bf16-input / f32-accumulate math as the kernel, for a tight check."""
    bf = jnp.bfloat16
    h = jnp.dot(x.astype(bf), params["w1"].astype(bf),
                preferred_element_type=jnp.float32) + params["b1"]
    h = jnp.maximum(h, 0.0).astype(bf)
    h = jnp.dot(h, params["w2"].astype(bf),
                preferred_element_type=jnp.float32) + params["b2"]
    h = jnp.maximum(h, 0.0).astype(bf)
    return jnp.dot(h, params["w3"].astype(bf),
                   preferred_element_type=jnp.float32) + params["b3"]


if __name__ == "__main__":
    num_actions = 8
    batch = 4

    key = jax.random.PRNGKey(0)
    k_x, k_p = jax.random.split(key)
    x = jax.random.normal(k_x, (batch, num_actions), dtype=jnp.float32)
    params = init_params(k_p, num_actions)

    out = jax.block_until_ready(qnetwork_forward(x, params))
    assert out.shape == (batch, num_actions)

    # Tight check vs. a reference using the same bf16/f32 mixed precision.
    ref_bf16 = qnetwork_ref_bf16(x, params)
    assert jnp.allclose(out, ref_bf16, atol=1e-2, rtol=1e-2), (
        f"max abs err vs bf16 ref: {jnp.max(jnp.abs(out - ref_bf16))}")

    # Loose check vs. the full-f32 reference (torch semantics).
    ref_f32 = qnetwork_ref_f32(x, params)
    assert jnp.allclose(out, ref_f32, atol=5e-2, rtol=5e-2), (
        f"max abs err vs f32 ref: {jnp.max(jnp.abs(out - ref_f32))}")

    print("KERNEL_OK")
</pallas_src>

<mosaic_0001>
module attributes {stable_mosaic.version = 11 : i64} {
  func.func @qnet_kernel(%arg0: i32, %arg1: memref<16x128xbf16, #tpu.memory_space<vmem>>, %arg2: memref<128x128xbf16, #tpu.memory_space<vmem>>, %arg3: memref<1x128xf32, #tpu.memory_space<vmem>>, %arg4: memref<128x64xbf16, #tpu.memory_space<vmem>>, %arg5: memref<1x64xf32, #tpu.memory_space<vmem>>, %arg6: memref<64x128xbf16, #tpu.memory_space<vmem>>, %arg7: memref<1x128xf32, #tpu.memory_space<vmem>>, %arg8: memref<16x128xf32, #tpu.memory_space<vmem>>) attributes {dimension_semantics = [#tpu.dimension_semantics<parallel>], iteration_bounds = array<i64: 1>, scalar_prefetch = 0 : i64, scratch_operands = 0 : i64, tpu.core_type = #tpu.core_type<tc>, window_params = [{transform_indices = @transform_0, window_bounds = array<i64: 16, 128>}, {pipeline_mode = #tpu.pipeline_mode<synchronous>, transform_indices = @transform_1, window_bounds = array<i64: 128, 128>}, {pipeline_mode = #tpu.pipeline_mode<synchronous>, transform_indices = @transform_2, window_bounds = array<i64: 1, 128>}, {pipeline_mode = #tpu.pipeline_mode<synchronous>, transform_indices = @transform_3, window_bounds = array<i64: 128, 64>}, {pipeline_mode = #tpu.pipeline_mode<synchronous>, transform_indices = @transform_4, window_bounds = array<i64: 1, 64>}, {pipeline_mode = #tpu.pipeline_mode<synchronous>, transform_indices = @transform_5, window_bounds = array<i64: 64, 128>}, {pipeline_mode = #tpu.pipeline_mode<synchronous>, transform_indices = @transform_6, window_bounds = array<i64: 1, 128>}, {transform_indices = @transform_7, window_bounds = array<i64: 16, 128>}]} {
    %c0 = arith.constant 0 : index
    %c0_0 = arith.constant 0 : index
    %0 = vector.load %arg1[%c0, %c0_0] : memref<16x128xbf16, #tpu.memory_space<vmem>>, vector<16x128xbf16>
    %c0_1 = arith.constant 0 : index
    %c0_2 = arith.constant 0 : index
    %1 = vector.load %arg2[%c0_1, %c0_2] : memref<128x128xbf16, #tpu.memory_space<vmem>>, vector<128x128xbf16>
    %cst = arith.constant dense<0.000000e+00> : vector<16x128xf32>
    %2 = tpu.matmul %0, %1, %cst {dimension_numbers = #tpu.dot_dimension_numbers<[1], [0], [0], [1], [0, 0, 1, 1], [], []>} : vector<16x128xbf16>, vector<128x128xbf16>, vector<16x128xf32> -> vector<16x128xf32>
    %c0_3 = arith.constant 0 : index
    %c0_4 = arith.constant 0 : index
    %3 = vector.load %arg3[%c0_3, %c0_4] : memref<1x128xf32, #tpu.memory_space<vmem>>, vector<1x128xf32>
    %4 = vector.broadcast %3 : vector<1x128xf32> to vector<16x128xf32>
    %5 = arith.addf %2, %4 : vector<16x128xf32>
    %cst_5 = arith.constant 0.000000e+00 : f32
    %6 = vector.broadcast %cst_5 : f32 to vector<16x128xf32>
    %7 = arith.maximumf %5, %6 : vector<16x128xf32>
    %8 = arith.truncf %7 : vector<16x128xf32> to vector<16x128xbf16>
    %c0_6 = arith.constant 0 : index
    %c0_7 = arith.constant 0 : index
    %9 = vector.load %arg4[%c0_6, %c0_7] : memref<128x64xbf16, #tpu.memory_space<vmem>>, vector<128x64xbf16>
    %cst_8 = arith.constant dense<0.000000e+00> : vector<16x64xf32>
    %10 = tpu.matmul %8, %9, %cst_8 {dimension_numbers = #tpu.dot_dimension_numbers<[1], [0], [0], [1], [0, 0, 1, 1], [], []>} : vector<16x128xbf16>, vector<128x64xbf16>, vector<16x64xf32> -> vector<16x64xf32>
    %c0_9 = arith.constant 0 : index
    %c0_10 = arith.constant 0 : index
    %11 = vector.load %arg5[%c0_9, %c0_10] : memref<1x64xf32, #tpu.memory_space<vmem>>, vector<1x64xf32>
    %12 = vector.broadcast %11 : vector<1x64xf32> to vector<16x64xf32>
    %13 = arith.addf %10, %12 : vector<16x64xf32>
    %cst_11 = arith.constant 0.000000e+00 : f32
    %14 = vector.broadcast %cst_11 : f32 to vector<16x64xf32>
    %15 = arith.maximumf %13, %14 : vector<16x64xf32>
    %16 = arith.truncf %15 : vector<16x64xf32> to vector<16x64xbf16>
    %c0_12 = arith.constant 0 : index
    %c0_13 = arith.constant 0 : index
    %17 = vector.load %arg6[%c0_12, %c0_13] : memref<64x128xbf16, #tpu.memory_space<vmem>>, vector<64x128xbf16>
    %cst_14 = arith.constant dense<0.000000e+00> : vector<16x128xf32>
    %18 = tpu.matmul %16, %17, %cst_14 {dimension_numbers = #tpu.dot_dimension_numbers<[1], [0], [0], [1], [0, 0, 1, 1], [], []>} : vector<16x64xbf16>, vector<64x128xbf16>, vector<16x128xf32> -> vector<16x128xf32>
    %c0_15 = arith.constant 0 : index
    %c0_16 = arith.constant 0 : index
    %19 = vector.load %arg7[%c0_15, %c0_16] : memref<1x128xf32, #tpu.memory_space<vmem>>, vector<1x128xf32>
    %20 = vector.broadcast %19 : vector<1x128xf32> to vector<16x128xf32>
    %21 = arith.addf %18, %20 : vector<16x128xf32>
    %c0_17 = arith.constant 0 : index
    %c0_18 = arith.constant 0 : index
    %22 = vector.load %arg8[%c0_17, %c0_18] : memref<16x128xf32, #tpu.memory_space<vmem>>, vector<16x128xf32>
    tpu.vector_store %arg8[%c0_17, %c0_18], %21 {strides = array<i32>} : memref<16x128xf32, #tpu.memory_space<vmem>>, vector<16x128xf32>,
    return
  }
  func.func @transform_0(%arg0: i32) -> (i32, i32) {
    %c0_i32 = arith.constant 0 : i32
    %c0_i32_0 = arith.constant 0 : i32
    return %arg0, %c0_i32 : i32, i32
  }
  func.func @transform_1(%arg0: i32) -> (i32, i32) {
    %c0_i32 = arith.constant 0 : i32
    %c0_i32_0 = arith.constant 0 : i32
    %c0_i32_1 = arith.constant 0 : i32
    return %c0_i32, %c0_i32_0 : i32, i32
  }
  func.func @transform_2(%arg0: i32) -> (i32, i32) {
    %c0_i32 = arith.constant 0 : i32
    %c0_i32_0 = arith.constant 0 : i32
    %c0_i32_1 = arith.constant 0 : i32
    return %c0_i32, %c0_i32_0 : i32, i32
  }
  func.func @transform_3(%arg0: i32) -> (i32, i32) {
    %c0_i32 = arith.constant 0 : i32
    %c0_i32_0 = arith.constant 0 : i32
    %c0_i32_1 = arith.constant 0 : i32
    return %c0_i32, %c0_i32_0 : i32, i32
  }
  func.func @transform_4(%arg0: i32) -> (i32, i32) {
    %c0_i32 = arith.constant 0 : i32
    %c0_i32_0 = arith.constant 0 : i32
    %c0_i32_1 = arith.constant 0 : i32
    return %c0_i32, %c0_i32_0 : i32, i32
  }
  func.func @transform_5(%arg0: i32) -> (i32, i32) {
    %c0_i32 = arith.constant 0 : i32
    %c0_i32_0 = arith.constant 0 : i32
    %c0_i32_1 = arith.constant 0 : i32
    return %c0_i32, %c0_i32_0 : i32, i32
  }
  func.func @transform_6(%arg0: i32) -> (i32, i32) {
    %c0_i32 = arith.constant 0 : i32
    %c0_i32_0 = arith.constant 0 : i32
    %c0_i32_1 = arith.constant 0 : i32
    return %c0_i32, %c0_i32_0 : i32, i32
  }
  func.func @transform_7(%arg0: i32) -> (i32, i32) {
    %c0_i32 = arith.constant 0 : i32
    %c0_i32_0 = arith.constant 0 : i32
    return %arg0, %c0_i32 : i32, i32
  }
}

</mosaic_0001>

<llo_original>
// kernel: tpu_custom_call.1
$region0: #{tpu_custom_call.1}
  #allocation0 [shape = 'u32[]', space=smem, size = 0x4, offset = 0x4, fixed_abs, tag = 'smem constant byte address 0x4 - core index']
  #allocation1 [shape = 'u32[144,128]{1,0:T(1,128)}', space=vmem, size = 0x12000, scoped, tag = 'internal scratch']
  %s0 = inlined_call_operand.hbm [shape: bf16[16,128], index: 0, kind: input, shape index: {}]
  %s1 = inlined_call_operand.vmem [shape: bf16[128,128], index: 1, kind: input, shape index: {}]
  %s2 = inlined_call_operand.vmem [shape: f32[1,128], index: 2, kind: input, shape index: {}]
  %s3 = inlined_call_operand.vmem [shape: bf16[128,64], index: 3, kind: input, shape index: {}]
  %s4 = inlined_call_operand.vmem [shape: f32[1,64], index: 4, kind: input, shape index: {}]
  %s5 = inlined_call_operand.vmem [shape: bf16[64,128], index: 5, kind: input, shape index: {}]
  %s6 = inlined_call_operand.vmem [shape: f32[1,128], index: 6, kind: input, shape index: {}]
  %s7 = inlined_call_operand.hbm [shape: f32[16,128], index: 7, kind: output, shape index: {}]
  %s8 = sld [smem:[#allocation0]]
  $region42: #{tpu_custom_call.1} parent=0
    _
  %s10 = ssub.s32 1, %s8
  %s11 = scalar_select 0, %s10, %s8
  $region1: #{tpu_custom_call.1} parent=0
    #allocation2 [shape = 'u8[4096]{0}', space=vmem, size = 0x1000, scoped, tag = 'input window, operand 0, single buffered']
    #allocation3 [shape = 's32[1]{0}', space=sflag, size = 0x4, scoped, tag = 'scoped memory for tpu_custom_call.1']
    #allocation4 [shape = 's32[1]{0}', space=sflag, size = 0x4, scoped, tag = 'scoped memory for tpu_custom_call.1']
    #allocation5 [shape = 'u8[8192]{0}', space=vmem, size = 0x2000, scoped, tag = 'output window, operand 0, single buffered']
    %12 = vsyncpa [#allocation3], 0
    %13 = vsyncpa [#allocation4], 0
    // Predicated region
    $region2: #{tpu_custom_call.1} parent=1 // pred_check
      _
    $region3: #{tpu_custom_call.1} parent=1 // pred_check_branch
      %15 = sbr.rel (0) target = $region5
    $region4: #{tpu_custom_call.1} parent=1 // pred_region
      %s17 = ssub.s32 128, 128
      %18 = vsyncadd [#allocation3], %s17
      %s19 = sshll.u32 [#allocation2], 4
      %s20 = int_to_ptr.vmem [resolvable:$true] %s19
      %25 = dma.hbm_to_vmem [thread:$0]  %s0, 128, %s20, [#allocation3], 64, 64, 4
    $region5: #{tpu_custom_call.1} parent=1 // pred_fallthru
      _
    // Predicated region
    $region6: #{tpu_custom_call.1} parent=1 // pred_check
      _
    $region7: #{tpu_custom_call.1} parent=1 // pred_check_branch
      %27 = sbr.rel (0) target = $region9
    $region8: #{tpu_custom_call.1} parent=1 // pred_region
      _
    $region9: #{tpu_custom_call.1} parent=1 // pred_fallthru
      _
    // Predicated region
    $region10: #{tpu_custom_call.1} parent=1 // pred_check
      _
    $region11: #{tpu_custom_call.1} parent=1 // pred_check_branch
      %29 = sbr.rel (0) target = $region13
    $region12: #{tpu_custom_call.1} parent=1 // pred_region
      _
    $region13: #{tpu_custom_call.1} parent=1 // pred_fallthru
      _
    // Predicated region
    $region14: #{tpu_custom_call.1} parent=1 // pred_check
      _
    $region15: #{tpu_custom_call.1} parent=1 // pred_check_branch
      %31 = sbr.rel (0) target = $region17
    $region16: #{tpu_custom_call.1} parent=1 // pred_region
      _
    $region17: #{tpu_custom_call.1} parent=1 // pred_fallthru
      _
    // Predicated region
    $region18: #{tpu_custom_call.1} parent=1 // pred_check
      _
    $region19: #{tpu_custom_call.1} parent=1 // pred_check_branch
      %33 = sbr.rel (0) target = $region21
    $region20: #{tpu_custom_call.1} parent=1 // pred_region
      _
    $region21: #{tpu_custom_call.1} parent=1 // pred_fallthru
      _
    // Predicated region
    $region22: #{tpu_custom_call.1} parent=1 // pred_check
      _
    $region23: #{tpu_custom_call.1} parent=1 // pred_check_branch
      %35 = sbr.rel (0) target = $region25
    $region24: #{tpu_custom_call.1} parent=1 // pred_region
      _
    $region25: #{tpu_custom_call.1} parent=1 // pred_fallthru
      _
    // Predicated region
    $region26: #{tpu_custom_call.1} parent=1 // pred_check
      _
    $region27: #{tpu_custom_call.1} parent=1 // pred_check_branch
      %37 = sbr.rel (0) target = $region29
    $region28: #{tpu_custom_call.1} parent=1 // pred_region
      _
    $region29: #{tpu_custom_call.1} parent=1 // pred_fallthru
      _
    // Predicated region
    $region30: #{tpu_custom_call.1} parent=1 // pred_check
      _
    $region31: #{tpu_custom_call.1} parent=1 // pred_check_branch
      %39 = sbr.rel (0) target = $region33
    $region32: #{tpu_custom_call.1} parent=1 // pred_region
      %40 = dma.done [#allocation3], 128
    $region33: #{tpu_custom_call.1} parent=1 // pred_fallthru
      _
    %v42 = vld [vmem:[#allocation2] sm:$0xf]
    %v43 = vld [vmem:[#allocation2 + $0x4] sm:$0xf]
    %v44 = vld [vmem:[%s1] sm:$0xf]
    %v45 = vld [vmem:[%s1 + $0x4] sm:$0xf]
    %v46 = vld [vmem:[%s1 + $0x8] sm:$0xf]
    %v47 = vld [vmem:[%s1 + $0xc] sm:$0xf]
    %v48 = vld [vmem:[%s1 + $0x10] sm:$0xf]
    %v49 = vld [vmem:[%s1 + $0x14] sm:$0xf]
    %v50 = vld [vmem:[%s1 + $0x18] sm:$0xf]
    %v51 = vld [vmem:[%s1 + $0x1c] sm:$0xf]
    %v52 = vld [vmem:[%s1 + $0x20] sm:$0xf]
    %v53 = vld [vmem:[%s1 + $0x24] sm:$0xf]
    %v54 = vld [vmem:[%s1 + $0x28] sm:$0xf]
    %v55 = vld [vmem:[%s1 + $0x2c] sm:$0xf]
    %v56 = vld [vmem:[%s1 + $0x30] sm:$0xf]
    %v57 = vld [vmem:[%s1 + $0x34] sm:$0xf]
    %v58 = vld [vmem:[%s1 + $0x38] sm:$0xf]
    %v59 = vld [vmem:[%s1 + $0x3c] sm:$0xf]
    %v60 = vld [vmem:[%s2] sm:$0x1]
    %v62 = vlaneseq
    %v63 = vshrl.u32 %v62, 7
    %v64 = vsub.s32 0, %v63
    %v65 = vrot.slane %v60, %v64
    %v69 = vunpack.c.l.b16 %v42
    %v70 = vunpack.c.l.b16 %v43
    %v71 = vpack.c.b16 %v70, %v69
    %v89 = vunpack.c.l.b16 %v44
    %v90 = vunpack.c.l.b16 %v45
    %v91 = vunpack.c.l.b16 %v46
    %v92 = vunpack.c.l.b16 %v47
    %v93 = vunpack.c.l.b16 %v48
    %v94 = vunpack.c.l.b16 %v49
    %v95 = vunpack.c.l.b16 %v50
    %v96 = vunpack.c.l.b16 %v51
    %v97 = vunpack.c.l.b16 %v52
    %v98 = vunpack.c.l.b16 %v53
    %v99 = vunpack.c.l.b16 %v54
    %v100 = vunpack.c.l.b16 %v55
    %v101 = vunpack.c.l.b16 %v56
    %v102 = vunpack.c.l.b16 %v57
    %v103 = vunpack.c.l.b16 %v58
    %v104 = vunpack.c.l.b16 %v59
    %v105 = vpack.c.b16 %v90, %v89
    %v106 = vpack.c.b16 %v92, %v91
    %v107 = vpack.c.b16 %v94, %v93
    %v108 = vpack.c.b16 %v96, %v95
    %v109 = vpack.c.b16 %v98, %v97
    %v110 = vpack.c.b16 %v100, %v99
    %v111 = vpack.c.b16 %v102, %v101
    %v112 = vpack.c.b16 %v104, %v103
    %121 = vmatprep.subr.bf16.mxu0 0
    %122 = vmatpush1.bf16.msra.mxu0 %v105
    %123 = vmatprep.subr.bf16.mxu0 0
    %124 = vmatpush1.bf16.msra.mxu0 %v106
    %125 = vmatprep.subr.bf16.mxu0 0
    %126 = vmatpush1.bf16.msra.mxu0 %v107
    %127 = vmatprep.subr.bf16.mxu0 0
    %128 = vmatpush1.bf16.msra.mxu0 %v108
    %129 = vmatprep.subr.bf16.mxu0 0
    %130 = vmatpush1.bf16.msra.mxu0 %v109
    %131 = vmatprep.subr.bf16.mxu0 0
    %132 = vmatpush1.bf16.msra.mxu0 %v110
    %133 = vmatprep.subr.bf16.mxu0 0
    %134 = vmatpush1.bf16.msra.mxu0 %v111
    %135 = vmatprep.subr.bf16.mxu0 0
    %136 = vmatpush1.bf16.msra.mxu0 %v112
    %137 = vmatprep.subr.bf16.mxu0 0
    %138 = vmatpush1.bf16.msra.mxu0 0
    %139 = vmatprep.subr.bf16.mxu0 0
    %140 = vmatpush1.bf16.msra.mxu0 0
    %141 = vmatprep.subr.bf16.mxu0 0
    %142 = vmatpush1.bf16.msra.mxu0 0
    %143 = vmatprep.subr.bf16.mxu0 0
    %144 = vmatpush1.bf16.msra.mxu0 0
    %145 = vmatprep.subr.bf16.mxu0 0
    %146 = vmatpush1.bf16.msra.mxu0 0
    %147 = vmatprep.subr.bf16.mxu0 0
    %148 = vmatpush1.bf16.msra.mxu0 0
    %149 = vmatprep.subr.bf16.mxu0 0
    %150 = vmatpush1.bf16.msra.mxu0 0
    %151 = vmatprep.subr.bf16.mxu0 0
    %152 = vmatpush1.bf16.msra.mxu0 0
    %153 = vmatprep.mubr.bf16.mxu0 0
    %154 = vmatmul.mubr.bf16.gmra.mrb[0].mxu0 %v71
    %v155 = vpop.f32.mrb[0].mxu0
    %v156 = vadd.f32 %v65, %v155
    %v157 = vpop.f32.mrb[0].mxu0
    %v158 = vpop.f32.mrb[0].mxu0
    %v159 = vadd.f32 %v65, %v158
    %v160 = vpop.f32.mrb[0].mxu0
    %161 = vdwg.mxu0
    %v162 = vmax.f32 %v156, 0.0
    %v163 = vmax.f32 %v159, 0.0
    %v164 = vpack.c.bf16 %v163, %v162
    %v165 = vld [vmem:[%s3] sm:$0xf]
    %v166 = vld [vmem:[%s3 + $0x4] sm:$0xf]
    %v167 = vld [vmem:[%s3 + $0x8] sm:$0xf]
    %v168 = vld [vmem:[%s3 + $0xc] sm:$0xf]
    %v169 = vld [vmem:[%s3 + $0x10] sm:$0xf]
    %v170 = vld [vmem:[%s3 + $0x14] sm:$0xf]
    %v171 = vld [vmem:[%s3 + $0x18] sm:$0xf]
    %v172 = vld [vmem:[%s3 + $0x1c] sm:$0xf]
    %v173 = vld [vmem:[%s3 + $0x20] sm:$0xf]
    %v174 = vld [vmem:[%s3 + $0x24] sm:$0xf]
    %v175 = vld [vmem:[%s3 + $0x28] sm:$0xf]
    %v176 = vld [vmem:[%s3 + $0x2c] sm:$0xf]
    %v177 = vld [vmem:[%s3 + $0x30] sm:$0xf]
    %v178 = vld [vmem:[%s3 + $0x34] sm:$0xf]
    %v179 = vld [vmem:[%s3 + $0x38] sm:$0xf]
    %v180 = vld [vmem:[%s3 + $0x3c] sm:$0xf]
    %v181 = vld [vmem:[%s4] sm:$0x1]
    %v183 = vlaneseq
    %v184 = vshrl.u32 %v183, 7
    %v185 = vsub.s32 0, %v184
    %v186 = vrot.slane %v181, %v185
    %v204 = vunpack.c.l.b16 %v165
    %v205 = vunpack.c.l.b16 %v166
    %v206 = vunpack.c.l.b16 %v167
    %v207 = vunpack.c.l.b16 %v168
    %v208 = vunpack.c.l.b16 %v169
    %v209 = vunpack.c.l.b16 %v170
    %v210 = vunpack.c.l.b16 %v171
    %v211 = vunpack.c.l.b16 %v172
    %v212 = vunpack.c.l.b16 %v173
    %v213 = vunpack.c.l.b16 %v174
    %v214 = vunpack.c.l.b16 %v175
    %v215 = vunpack.c.l.b16 %v176
    %v216 = vunpack.c.l.b16 %v177
    %v217 = vunpack.c.l.b16 %v178
    %v218 = vunpack.c.l.b16 %v179
    %v219 = vunpack.c.l.b16 %v180
    %v220 = vpack.c.b16 %v205, %v204
    %v221 = vpack.c.b16 %v207, %v206
    %v222 = vpack.c.b16 %v209, %v208
    %v223 = vpack.c.b16 %v211, %v210
    %v224 = vpack.c.b16 %v213, %v212
    %v225 = vpack.c.b16 %v215, %v214
    %v226 = vpack.c.b16 %v217, %v216
    %v227 = vpack.c.b16 %v219, %v218
    %236 = vmatprep.subr.bf16.mxu0 0
    %237 = vmatpush1.bf16.msra.mxu0 %v220
    %238 = vmatprep.subr.bf16.mxu0 0
    %239 = vmatpush1.bf16.msra.mxu0 %v221
    %240 = vmatprep.subr.bf16.mxu0 0
    %241 = vmatpush1.bf16.msra.mxu0 %v222
    %242 = vmatprep.subr.bf16.mxu0 0
    %243 = vmatpush1.bf16.msra.mxu0 %v223
    %244 = vmatprep.subr.bf16.mxu0 0
    %245 = vmatpush1.bf16.msra.mxu0 %v224
    %246 = vmatprep.subr.bf16.mxu0 0
    %247 = vmatpush1.bf16.msra.mxu0 %v225
    %248 = vmatprep.subr.bf16.mxu0 0
    %249 = vmatpush1.bf16.msra.mxu0 %v226
    %250 = vmatprep.subr.bf16.mxu0 0
    %251 = vmatpush1.bf16.msra.mxu0 %v227
    %252 = vmatprep.subr.bf16.mxu0 0
    %253 = vmatpush1.bf16.msra.mxu0 0
    %254 = vmatprep.subr.bf16.mxu0 0
    %255 = vmatpush1.bf16.msra.mxu0 0
    %256 = vmatprep.subr.bf16.mxu0 0
    %257 = vmatpush1.bf16.msra.mxu0 0
    %258 = vmatprep.subr.bf16.mxu0 0
    %259 = vmatpush1.bf16.msra.mxu0 0
    %260 = vmatprep.subr.bf16.mxu0 0
    %261 = vmatpush1.bf16.msra.mxu0 0
    %262 = vmatprep.subr.bf16.mxu0 0
    %263 = vmatpush1.bf16.msra.mxu0 0
    %264 = vmatprep.subr.bf16.mxu0 0
    %265 = vmatpush1.bf16.msra.mxu0 0
    %266 = vmatprep.subr.bf16.mxu0 0
    %267 = vmatpush1.bf16.msra.mxu0 0
    %268 = vmatprep.mubr.bf16.mxu0 0
    %269 = vmatmul.mubr.bf16.gmra.mrb[0].mxu0 %v164
    %v270 = vpop.f32.mrb[0].mxu0
    %v271 = vadd.f32 %v186, %v270
    %v272 = vpop.f32.mrb[0].mxu0
    %v273 = vpop.f32.mrb[0].mxu0
    %v274 = vadd.f32 %v186, %v273
    %v275 = vpop.f32.mrb[0].mxu0
    %276 = vdwg.mxu0
    %v277 = vmax.f32 %v271, 0.0
    %v278 = vmax.f32 %v274, 0.0
    %v279 = vpack.c.bf16 %v278, %v277
    %v280 = vld [vmem:[%s5] sm:$0xf]
    %v281 = vld [vmem:[%s5 + $0x4] sm:$0xf]
    %v282 = vld [vmem:[%s5 + $0x8] sm:$0xf]
    %v283 = vld [vmem:[%s5 + $0xc] sm:$0xf]
    %v284 = vld [vmem:[%s5 + $0x10] sm:$0xf]
    %v285 = vld [vmem:[%s5 + $0x14] sm:$0xf]
    %v286 = vld [vmem:[%s5 + $0x18] sm:$0xf]
    %v287 = vld [vmem:[%s5 + $0x1c] sm:$0xf]
    %v288 = vld [vmem:[%s6] sm:$0x1]
    %v290 = vlaneseq
    %v291 = vshrl.u32 %v290, 7
    %v292 = vsub.s32 0, %v291
    %v293 = vrot.slane %v288, %v292
    %v303 = vunpack.c.l.b16 %v280
    %v304 = vunpack.c.l.b16 %v281
    %v305 = vunpack.c.l.b16 %v282
    %v306 = vunpack.c.l.b16 %v283
    %v307 = vunpack.c.l.b16 %v284
    %v308 = vunpack.c.l.b16 %v285
    %v309 = vunpack.c.l.b16 %v286
    %v310 = vunpack.c.l.b16 %v287
    %v311 = vpack.c.b16 %v304, %v303
    %v312 = vpack.c.b16 %v306, %v305
    %v313 = vpack.c.b16 %v308, %v307
    %v314 = vpack.c.b16 %v310, %v309
    %vm319 = vcmask 523264
    %v321 = vsel %vm319, %v279, 0
    %323 = vmatprep.subr.bf16.mxu0 0
    %324 = vmatpush1.bf16.msra.mxu0 %v311
    %325 = vmatprep.subr.bf16.mxu0 0
    %326 = vmatpush1.bf16.msra.mxu0 %v312
    %327 = vmatprep.subr.bf16.mxu0 0
    %328 = vmatpush1.bf16.msra.mxu0 %v313
    %329 = vmatprep.subr.bf16.mxu0 0
    %330 = vmatpush1.bf16.msra.mxu0 %v314
    %331 = vmatprep.subr.bf16.mxu0 0
    %332 = vmatpush1.bf16.msra.mxu0 0
    %333 = vmatprep.subr.bf16.mxu0 0
    %334 = vmatpush1.bf16.msra.mxu0 0
    %335 = vmatprep.subr.bf16.mxu0 0
    %336 = vmatpush1.bf16.msra.mxu0 0
    %337 = vmatprep.subr.bf16.mxu0 0
    %338 = vmatpush1.bf16.msra.mxu0 0
    %339 = vmatprep.subr.bf16.mxu0 0
    %340 = vmatpush1.bf16.msra.mxu0 0
    %341 = vmatprep.subr.bf16.mxu0 0
    %342 = vmatpush1.bf16.msra.mxu0 0
    %343 = vmatprep.subr.bf16.mxu0 0
    %344 = vmatpush1.bf16.msra.mxu0 0
    %345 = vmatprep.subr.bf16.mxu0 0
    %346 = vmatpush1.bf16.msra.mxu0 0
    %347 = vmatprep.subr.bf16.mxu0 0
    %348 = vmatpush1.bf16.msra.mxu0 0
    %349 = vmatprep.subr.bf16.mxu0 0
    %350 = vmatpush1.bf16.msra.mxu0 0
    %351 = vmatprep.subr.bf16.mxu0 0
    %352 = vmatpush1.bf16.msra.mxu0 0
    %353 = vmatprep.subr.bf16.mxu0 0
    %354 = vmatpush1.bf16.msra.mxu0 0
    %355 = vmatprep.mubr.bf16.mxu0 0
    %356 = vmatmul.mubr.bf16.gmra.mrb[0].mxu0 %v321
    %v357 = vpop.f32.mrb[0].mxu0
    %v358 = vadd.f32 %v293, %v357
    %v359 = vpop.f32.mrb[0].mxu0
    %v360 = vpop.f32.mrb[0].mxu0
    %v361 = vadd.f32 %v293, %v360
    %v362 = vpop.f32.mrb[0].mxu0
    %363 = vdwg.mxu0
    %364 = vst [vmem:[#allocation5] sm:$0xff] %v358
    %365 = vst [vmem:[#allocation5 + $0x8] sm:$0xff] %v361
    // Predicated region
    $region34: #{tpu_custom_call.1} parent=1 // pred_check
      _
    $region35: #{tpu_custom_call.1} parent=1 // pred_check_branch
      %367 = sbr.rel (0) target = $region37
    $region36: #{tpu_custom_call.1} parent=1 // pred_region
      %s369 = ssub.s32 256, 256
      %370 = vsyncadd [#allocation4], %s369
      %s371 = sshll.u32 [#allocation5], 4
      %s372 = int_to_ptr.vmem [resolvable:$true] %s371
      %377 = dma.vmem_to_hbm [thread:$0]  %s372, 256, %s7, [#allocation4], 128, 128, 8
    $region37: #{tpu_custom_call.1} parent=1 // pred_fallthru
      _
    // Predicated region
    $region38: #{tpu_custom_call.1} parent=1 // pred_check
      _
    $region39: #{tpu_custom_call.1} parent=1 // pred_check_branch
      %379 = sbr.rel (0) target = $region41
    $region40: #{tpu_custom_call.1} parent=1 // pred_region
      %380 = dma.done [#allocation4], 256
    $region41: #{tpu_custom_call.1} parent=1 // pred_fallthru
      _
    %381 = vsyncpa [#allocation3], 1
    %382 = vsyncpa [#allocation4], 1

</llo_original>
